<compile_context>
chip_gen: v7x
topology: tpu7x:2x2x1
jax: 0.10.0
libtpu: 0.0.40
codegen_flags: <defaults>
</compile_context>

<pallas_src>
import functools

import jax
import jax.numpy as jnp
from jax.experimental import pallas as pl
from jax.experimental.pallas import tpu as pltpu

_SQRT_HALF = 0.7071067811865476


def _layer_norm(x, gamma, beta, eps):
    # Single pass statistics: biased variance = E[x^2] - mean^2 (matches torch).
    mean = jnp.mean(x, axis=-1, keepdims=True)
    var = jnp.maximum(jnp.mean(x * x, axis=-1, keepdims=True) - mean * mean, 0.0)
    inv = jax.lax.rsqrt(var + eps)
    return (x - mean) * (inv * gamma) + beta


def _gelu(h):
    # Exact (erf) GELU like torch.nn.functional.gelu default.
    return 0.5 * h * (1.0 + jax.lax.erf(h * _SQRT_HALF))


# --------------------------------------------------------------------------- #
# Kernel 1: resident-weight path (weights fit VMEM; row grid only).
# --------------------------------------------------------------------------- #
def _ffn_resident_kernel(x_ref, gamma_ref, beta_ref, w1_ref, b1_ref, w2_ref,
                         b2_ref, o_ref, *, eps, matmul_dtype):
    x = x_ref[...].astype(jnp.float32)                       # (tr, d_in)
    xn = _layer_norm(x, gamma_ref[...].astype(jnp.float32),
                     beta_ref[...].astype(jnp.float32), eps)
    del x  # do not keep the residual copy live across the matmuls

    h = jnp.dot(xn.astype(matmul_dtype), w1_ref[...],
                preferred_element_type=jnp.float32)
    h = _gelu(h + b1_ref[...].astype(jnp.float32))

    y = jnp.dot(h.astype(matmul_dtype), w2_ref[...],
                preferred_element_type=jnp.float32)
    y = y + b2_ref[...].astype(jnp.float32)
    # Residual re-loaded from the VMEM-resident x tile at the final add.
    o_ref[...] = (y + x_ref[...].astype(jnp.float32)).astype(o_ref.dtype)


# --------------------------------------------------------------------------- #
# Kernel 2: d_hid-tiled weight-streaming path (grid = (rows, d_hid tiles)).
# --------------------------------------------------------------------------- #
def _ffn_stream_kernel(x_ref, gamma_ref, beta_ref, w1_ref, b1_ref, w2_ref,
                       b2_ref, o_ref, xn_ref, acc_ref, *, eps, matmul_dtype):
    k = pl.program_id(1)

    @pl.when(k == 0)
    def _():
        x = x_ref[...].astype(jnp.float32)
        xn = _layer_norm(x, gamma_ref[...].astype(jnp.float32),
                         beta_ref[...].astype(jnp.float32), eps)
        xn_ref[...] = xn.astype(xn_ref.dtype)
        acc_ref[...] = jnp.zeros_like(acc_ref)

    h = jnp.dot(xn_ref[...], w1_ref[...], preferred_element_type=jnp.float32)
    h = _gelu(h + b1_ref[...].astype(jnp.float32))
    acc_ref[...] += jnp.dot(h.astype(matmul_dtype), w2_ref[...],
                            preferred_element_type=jnp.float32)

    @pl.when(k == pl.num_programs(1) - 1)
    def _():
        y = acc_ref[...] + b2_ref[...].astype(jnp.float32)
        o_ref[...] = (y + x_ref[...].astype(jnp.float32)).astype(o_ref.dtype)


# --------------------------------------------------------------------------- #
# Host wrapper.
# --------------------------------------------------------------------------- #
def _round_up(v, m):
    return ((v + m - 1) // m) * m


def _vmem_budget_bytes():
    """Usable per-core VMEM (physical capacity minus Mosaic-scratch headroom)."""
    cap = 64 << 20  # conservative default == v7x per-TC VMEM
    try:
        cap = int(pltpu.get_tpu_info().vmem_capacity_bytes)
    except Exception:
        pass
    return max(cap - (16 << 20), 32 << 20)


def positionwise_ffn(x, gamma, beta, w1, b1, w2, b2, *, eps=1e-6,
                     tile_rows=None, tk=None, use_bf16_matmul=True,
                     force_stream=False):
    """Pre-norm FFN.  x: (B, S, d_in); w1: (d_in, d_hid); w2: (d_hid, d_in).

    Weights are stored transposed vs. nn.Linear, i.e. (in_features, out_features).
    Dropout is identity (eval mode).
    """
    B, S, d_in = x.shape
    d_hid = w1.shape[1]
    N = B * S

    matmul_dtype = jnp.bfloat16 if use_bf16_matmul else jnp.float32
    x_item = jnp.dtype(x.dtype).itemsize
    w_item = jnp.dtype(matmul_dtype).itemsize
    budget = _vmem_budget_bytes()

    def pick_tile_rows(target):
        # Keep at least two row tiles when N allows (v7x megacore sharding),
        # rows always a multiple of 8 (sublane alignment).
        cap = max(8, _round_up(-(-N // 2), 8))
        return max(8, min(_round_up(target, 8), cap))

    def resident_footprint(tr):
        return (2 * d_in * d_hid * w_item            # W1 + W2, Buffered(1)
                + (3 * d_in + d_hid) * 4             # gamma, beta, b1, b2
                + 3 * tr * d_in * x_item             # x tile (up to 3 buffers)
                + 2 * tr * d_in * x_item             # out tile, double buffered
                + tr * d_hid * 4                     # h intermediate
                + 2 * tr * d_in * 4)                 # xn / misc f32 temporaries

    def stream_footprint(tr, t):
        return (4 * tr * d_in * x_item               # x + out tiles, double buffered
                + tr * d_in * (4 + w_item)           # acc (f32) + xn scratch
                + 3 * d_in * 4                       # gamma, beta, b2
                + 4 * d_in * t * w_item              # W1 + W2 blocks, double buffered
                + 2 * t * 4                          # b1 block
                + tr * t * 4)                        # h intermediate

    resident_rows = pick_tile_rows(256 if tile_rows is None else tile_rows)
    can_stream = (d_hid % 128 == 0)
    use_stream = (force_stream and can_stream) or (
        can_stream and resident_footprint(resident_rows) > 0.9 * budget)
    # TODO(synk): if weights don't fit and d_hid is not a multiple of 128, the
    #             resident path still runs but may spill; pad weights once.

    # Flatten rows; no host-side pad -- the grid's ragged last tile is clipped
    # by Pallas on store, so no extra HBM pass and no trailing slice.
    x2 = x.reshape(N, d_in)
    gamma2 = gamma.reshape(1, d_in).astype(jnp.float32)
    beta2 = beta.reshape(1, d_in).astype(jnp.float32)
    b1_2 = b1.reshape(1, d_hid).astype(jnp.float32)
    b2_2 = b2.reshape(1, d_in).astype(jnp.float32)
    w1c = w1.astype(matmul_dtype)
    w2c = w2.astype(matmul_dtype)

    cost = pl.CostEstimate(
        flops=4 * N * d_in * d_hid,
        transcendentals=N * d_hid,
        bytes_accessed=(2 * N * d_in * x_item + 2 * d_in * d_hid * w_item
                        + (3 * d_in + d_hid) * 4),
    )

    if not use_stream:
        tr = resident_rows
        n_tiles = pl.cdiv(N, tr)
        x_buf = 3 if n_tiles >= 3 else 2            # deepen x pipelining when useful
        vmem_limit = int(min(budget, max(2 * resident_footprint(tr), 24 << 20)))

        def const_spec(shape):
            return pl.BlockSpec(shape, lambda i: (0, 0),
                                pipeline_mode=pl.Buffered(1))

        grid_spec = pltpu.PrefetchScalarGridSpec(
            num_scalar_prefetch=0,
            grid=(n_tiles,),
            in_specs=[
                pl.BlockSpec((tr, d_in), lambda i: (i, 0),
                             pipeline_mode=pl.Buffered(x_buf)),   # x rows
                const_spec((1, d_in)),                            # gamma
                const_spec((1, d_in)),                            # beta
                const_spec((d_in, d_hid)),                        # W1 (resident)
                const_spec((1, d_hid)),                           # b1
                const_spec((d_hid, d_in)),                        # W2 (resident)
                const_spec((1, d_in)),                            # b2
            ],
            out_specs=pl.BlockSpec((tr, d_in), lambda i: (i, 0)),
        )
        out2 = pl.pallas_call(
            functools.partial(_ffn_resident_kernel, eps=eps,
                              matmul_dtype=matmul_dtype),
            out_shape=jax.ShapeDtypeStruct((N, d_in), x.dtype),
            grid_spec=grid_spec,
            compiler_params=pltpu.CompilerParams(
                dimension_semantics=("parallel",),
                vmem_limit_bytes=vmem_limit),
            cost_estimate=cost,
        )(x2, gamma2, beta2, w1c, b1_2, w2c, b2_2)
    else:
        rows = pick_tile_rows(512 if tile_rows is None else tile_rows)
        tk_opts = [t for t in range(128, d_hid + 1, 128) if d_hid % t == 0]
        if tk is not None:
            assert d_hid % tk == 0 and tk % 128 == 0, "tk must divide d_hid (x128)"
            chosen_tk = tk
        else:
            chosen_tk = None
            while chosen_tk is None:
                fitting = [t for t in tk_opts
                           if stream_footprint(rows, t) <= 0.9 * budget]
                if fitting:
                    chosen_tk = max(fitting)
                elif rows > 8:
                    rows = max(8, _round_up(rows // 2, 8))
                else:
                    chosen_tk = tk_opts[0]       # last resort; rely on headroom
        tr = rows
        n_tiles = pl.cdiv(N, tr)
        nk = d_hid // chosen_tk
        vmem_limit = int(min(budget, max(2 * stream_footprint(tr, chosen_tk),
                                         24 << 20)))

        def const_spec2(shape):
            return pl.BlockSpec(shape, lambda i, k: (0, 0),
                                pipeline_mode=pl.Buffered(1))

        grid_spec = pltpu.PrefetchScalarGridSpec(
            num_scalar_prefetch=0,
            grid=(n_tiles, nk),
            in_specs=[
                pl.BlockSpec((tr, d_in), lambda i, k: (i, 0)),           # x rows
                const_spec2((1, d_in)),                                  # gamma
                const_spec2((1, d_in)),                                  # beta
                pl.BlockSpec((d_in, chosen_tk), lambda i, k: (0, k)),    # W1 block
                pl.BlockSpec((1, chosen_tk), lambda i, k: (0, k)),       # b1 block
                pl.BlockSpec((chosen_tk, d_in), lambda i, k: (k, 0)),    # W2 block
                const_spec2((1, d_in)),                                  # b2
            ],
            out_specs=pl.BlockSpec((tr, d_in), lambda i, k: (i, 0)),
            scratch_shapes=[pltpu.VMEM((tr, d_in), matmul_dtype),        # xn cache
                            pltpu.VMEM((tr, d_in), jnp.float32)],        # accumulator
        )
        out2 = pl.pallas_call(
            functools.partial(_ffn_stream_kernel, eps=eps,
                              matmul_dtype=matmul_dtype),
            out_shape=jax.ShapeDtypeStruct((N, d_in), x.dtype),
            grid_spec=grid_spec,
            compiler_params=pltpu.CompilerParams(
                dimension_semantics=("parallel", "arbitrary"),
                vmem_limit_bytes=vmem_limit),
            cost_estimate=cost,
        )(x2, gamma2, beta2, w1c, b1_2, w2c, b2_2)

    return out2.reshape(B, S, d_in)


def _reference(x, gamma, beta, w1, b1, w2, b2, eps=1e-6):
    xf = x.astype(jnp.float32)
    residual = xf
    mean = jnp.mean(xf, axis=-1, keepdims=True)
    var = jnp.mean((xf - mean) ** 2, axis=-1, keepdims=True)
    xn = (xf - mean) * jax.lax.rsqrt(var + eps) * gamma + beta
    h = xn @ w1 + b1
    h = 0.5 * h * (1.0 + jax.lax.erf(h / jnp.sqrt(2.0)))
    y = h @ w2 + b2
    return (y + residual).astype(x.dtype)


if __name__ == "__main__":
    key = jax.random.PRNGKey(0)
    # Small but lane-dense shapes (d_in multiple of 128 -> unmasked stores).
    B, S, d_in, d_hid = 2, 8, 128, 256

    k_x, k_w1, k_b1, k_w2, k_b2 = jax.random.split(key, 5)
    x = jax.random.normal(k_x, (B, S, d_in), dtype=jnp.float32)

    # Deterministic synthetic parameters, stored transposed vs nn.Linear: (in, out).
    w1 = jax.random.normal(k_w1, (d_in, d_hid), dtype=jnp.float32) * (1.0 / d_in ** 0.5)
    b1 = jax.random.normal(k_b1, (d_hid,), dtype=jnp.float32) * 0.01
    w2 = jax.random.normal(k_w2, (d_hid, d_in), dtype=jnp.float32) * (1.0 / d_hid ** 0.5)
    b2 = jax.random.normal(k_b2, (d_in,), dtype=jnp.float32) * 0.01
    gamma = jnp.ones((d_in,), dtype=jnp.float32)
    beta = jnp.zeros((d_in,), dtype=jnp.float32)

    ref = _reference(x, gamma, beta, w1, b1, w2, b2)

    # Path 1: resident-weight kernel.
    out = jax.block_until_ready(positionwise_ffn(x, gamma, beta, w1, b1, w2, b2))
    assert out.shape == (B, S, d_in)
    assert jnp.allclose(out, ref, atol=5e-2, rtol=5e-2), (
        "resident path mismatch, max abs err = %f"
        % float(jnp.max(jnp.abs(out - ref))))

    # Path 2: d_hid-tiled weight-streaming kernel (forced, tk=128 -> 2 k-steps).
    out_s = jax.block_until_ready(
        positionwise_ffn(x, gamma, beta, w1, b1, w2, b2,
                         force_stream=True, tk=128))
    assert out_s.shape == (B, S, d_in)
    assert jnp.allclose(out_s, ref, atol=5e-2, rtol=5e-2), (
        "streaming path mismatch, max abs err = %f"
        % float(jnp.max(jnp.abs(out_s - ref))))

    print("KERNEL_OK")
</pallas_src>

<mosaic_0001>
module attributes {stable_mosaic.version = 11 : i64} {
  func.func @_ffn_resident_kernel(%arg0: i32, %arg1: memref<8x128xf32, #tpu.memory_space<vmem>>, %arg2: memref<1x128xf32, #tpu.memory_space<vmem>>, %arg3: memref<1x128xf32, #tpu.memory_space<vmem>>, %arg4: memref<128x256xbf16, #tpu.memory_space<vmem>>, %arg5: memref<1x256xf32, #tpu.memory_space<vmem>>, %arg6: memref<256x128xbf16, #tpu.memory_space<vmem>>, %arg7: memref<1x128xf32, #tpu.memory_space<vmem>>, %arg8: memref<8x128xf32, #tpu.memory_space<vmem>>) attributes {dimension_semantics = [#tpu.dimension_semantics<parallel>], iteration_bounds = array<i64: 2>, scalar_prefetch = 0 : i64, scratch_operands = 0 : i64, tpu.core_type = #tpu.core_type<tc>, window_params = [{pipeline_mode = #tpu.pipeline_mode<double_buffered>, transform_indices = @transform_0, window_bounds = array<i64: 8, 128>}, {pipeline_mode = #tpu.pipeline_mode<synchronous>, transform_indices = @transform_1, window_bounds = array<i64: 1, 128>}, {pipeline_mode = #tpu.pipeline_mode<synchronous>, transform_indices = @transform_2, window_bounds = array<i64: 1, 128>}, {pipeline_mode = #tpu.pipeline_mode<synchronous>, transform_indices = @transform_3, window_bounds = array<i64: 128, 256>}, {pipeline_mode = #tpu.pipeline_mode<synchronous>, transform_indices = @transform_4, window_bounds = array<i64: 1, 256>}, {pipeline_mode = #tpu.pipeline_mode<synchronous>, transform_indices = @transform_5, window_bounds = array<i64: 256, 128>}, {pipeline_mode = #tpu.pipeline_mode<synchronous>, transform_indices = @transform_6, window_bounds = array<i64: 1, 128>}, {transform_indices = @transform_7, window_bounds = array<i64: 8, 128>}]} {
    %c0 = arith.constant 0 : index
    %c0_0 = arith.constant 0 : index
    %0 = vector.load %arg1[%c0, %c0_0] : memref<8x128xf32, #tpu.memory_space<vmem>>, vector<8x128xf32>
    %c0_1 = arith.constant 0 : index
    %c0_2 = arith.constant 0 : index
    %1 = vector.load %arg2[%c0_1, %c0_2] : memref<1x128xf32, #tpu.memory_space<vmem>>, vector<1x128xf32>
    %c0_3 = arith.constant 0 : index
    %c0_4 = arith.constant 0 : index
    %2 = vector.load %arg3[%c0_3, %c0_4] : memref<1x128xf32, #tpu.memory_space<vmem>>, vector<1x128xf32>
    %cst = arith.constant dense<0.000000e+00> : vector<8xf32>
    %3 = vector.multi_reduction <add>, %0, %cst [1] : vector<8x128xf32> to vector<8xf32>
    %4 = vector.shape_cast %3 : vector<8xf32> to vector<8x1xf32>
    %cst_5 = arith.constant 1.280000e+02 : f32
    %5 = vector.broadcast %cst_5 : f32 to vector<8x1xf32>
    %6 = arith.divf %4, %5 : vector<8x1xf32>
    %7 = arith.mulf %0, %0 : vector<8x128xf32>
    %cst_6 = arith.constant dense<0.000000e+00> : vector<8xf32>
    %8 = vector.multi_reduction <add>, %7, %cst_6 [1] : vector<8x128xf32> to vector<8xf32>
    %9 = vector.shape_cast %8 : vector<8xf32> to vector<8x1xf32>
    %cst_7 = arith.constant 1.280000e+02 : f32
    %10 = vector.broadcast %cst_7 : f32 to vector<8x1xf32>
    %11 = arith.divf %9, %10 : vector<8x1xf32>
    %12 = arith.mulf %6, %6 : vector<8x1xf32>
    %13 = arith.subf %11, %12 : vector<8x1xf32>
    %cst_8 = arith.constant 0.000000e+00 : f32
    %14 = vector.broadcast %cst_8 : f32 to vector<8x1xf32>
    %15 = arith.maximumf %13, %14 : vector<8x1xf32>
    %cst_9 = arith.constant 9.99999997E-7 : f32
    %16 = vector.broadcast %cst_9 : f32 to vector<8x1xf32>
    %17 = arith.addf %15, %16 : vector<8x1xf32>
    %18 = math.rsqrt %17 : vector<8x1xf32>
    %19 = vector.broadcast %6 : vector<8x1xf32> to vector<8x128xf32>
    %20 = arith.subf %0, %19 : vector<8x128xf32>
    %21 = vector.broadcast %18 : vector<8x1xf32> to vector<8x128xf32>
    %22 = vector.broadcast %1 : vector<1x128xf32> to vector<8x128xf32>
    %23 = arith.mulf %21, %22 : vector<8x128xf32>
    %24 = arith.mulf %20, %23 : vector<8x128xf32>
    %25 = vector.broadcast %2 : vector<1x128xf32> to vector<8x128xf32>
    %26 = arith.addf %24, %25 : vector<8x128xf32>
    %27 = arith.truncf %26 : vector<8x128xf32> to vector<8x128xbf16>
    %c0_10 = arith.constant 0 : index
    %c0_11 = arith.constant 0 : index
    %28 = vector.load %arg4[%c0_10, %c0_11] : memref<128x256xbf16, #tpu.memory_space<vmem>>, vector<128x256xbf16>
    %cst_12 = arith.constant dense<0.000000e+00> : vector<8x256xf32>
    %29 = tpu.matmul %27, %28, %cst_12 {dimension_numbers = #tpu.dot_dimension_numbers<[1], [0], [0], [1], [0, 0, 1, 1], [], []>} : vector<8x128xbf16>, vector<128x256xbf16>, vector<8x256xf32> -> vector<8x256xf32>
    %c0_13 = arith.constant 0 : index
    %c0_14 = arith.constant 0 : index
    %30 = vector.load %arg5[%c0_13, %c0_14] : memref<1x256xf32, #tpu.memory_space<vmem>>, vector<1x256xf32>
    %31 = vector.broadcast %30 : vector<1x256xf32> to vector<8x256xf32>
    %32 = arith.addf %29, %31 : vector<8x256xf32>
    %cst_15 = arith.constant 5.000000e-01 : f32
    %33 = vector.broadcast %cst_15 : f32 to vector<8x256xf32>
    %34 = arith.mulf %33, %32 : vector<8x256xf32>
    %cst_16 = arith.constant 0.707106769 : f32
    %35 = vector.broadcast %cst_16 : f32 to vector<8x256xf32>
    %36 = arith.mulf %32, %35 : vector<8x256xf32>
    %37 = math.erf %36 : vector<8x256xf32>
    %cst_17 = arith.constant 1.000000e+00 : f32
    %38 = vector.broadcast %cst_17 : f32 to vector<8x256xf32>
    %39 = arith.addf %38, %37 : vector<8x256xf32>
    %40 = arith.mulf %34, %39 : vector<8x256xf32>
    %41 = arith.truncf %40 : vector<8x256xf32> to vector<8x256xbf16>
    %c0_18 = arith.constant 0 : index
    %c0_19 = arith.constant 0 : index
    %42 = vector.load %arg6[%c0_18, %c0_19] : memref<256x128xbf16, #tpu.memory_space<vmem>>, vector<256x128xbf16>
    %cst_20 = arith.constant dense<0.000000e+00> : vector<8x128xf32>
    %43 = tpu.matmul %41, %42, %cst_20 {dimension_numbers = #tpu.dot_dimension_numbers<[1], [0], [0], [1], [0, 0, 1, 1], [], []>} : vector<8x256xbf16>, vector<256x128xbf16>, vector<8x128xf32> -> vector<8x128xf32>
    %c0_21 = arith.constant 0 : index
    %c0_22 = arith.constant 0 : index
    %44 = vector.load %arg7[%c0_21, %c0_22] : memref<1x128xf32, #tpu.memory_space<vmem>>, vector<1x128xf32>
    %45 = vector.broadcast %44 : vector<1x128xf32> to vector<8x128xf32>
    %46 = arith.addf %43, %45 : vector<8x128xf32>
    %c0_23 = arith.constant 0 : index
    %c0_24 = arith.constant 0 : index
    %47 = vector.load %arg1[%c0_23, %c0_24] : memref<8x128xf32, #tpu.memory_space<vmem>>, vector<8x128xf32>
    %48 = arith.addf %46, %47 : vector<8x128xf32>
    %c0_25 = arith.constant 0 : index
    %c0_26 = arith.constant 0 : index
    %49 = vector.load %arg8[%c0_25, %c0_26] : memref<8x128xf32, #tpu.memory_space<vmem>>, vector<8x128xf32>
    tpu.vector_store %arg8[%c0_25, %c0_26], %48 {strides = array<i32>} : memref<8x128xf32, #tpu.memory_space<vmem>>, vector<8x128xf32>,
    return
  }
  func.func @transform_0(%arg0: i32) -> (i32, i32) {
    %c0_i32 = arith.constant 0 : i32
    %c0_i32_0 = arith.constant 0 : i32
    return %arg0, %c0_i32 : i32, i32
  }
  func.func @transform_1(%arg0: i32) -> (i32, i32) {
    %c0_i32 = arith.constant 0 : i32
    %c0_i32_0 = arith.constant 0 : i32
    %c0_i32_1 = arith.constant 0 : i32
    return %c0_i32, %c0_i32_0 : i32, i32
  }
  func.func @transform_2(%arg0: i32) -> (i32, i32) {
    %c0_i32 = arith.constant 0 : i32
    %c0_i32_0 = arith.constant 0 : i32
    %c0_i32_1 = arith.constant 0 : i32
    return %c0_i32, %c0_i32_0 : i32, i32
  }
  func.func @transform_3(%arg0: i32) -> (i32, i32) {
    %c0_i32 = arith.constant 0 : i32
    %c0_i32_0 = arith.constant 0 : i32
    %c0_i32_1 = arith.constant 0 : i32
    return %c0_i32, %c0_i32_0 : i32, i32
  }
  func.func @transform_4(%arg0: i32) -> (i32, i32) {
    %c0_i32 = arith.constant 0 : i32
    %c0_i32_0 = arith.constant 0 : i32
    %c0_i32_1 = arith.constant 0 : i32
    return %c0_i32, %c0_i32_0 : i32, i32
  }
  func.func @transform_5(%arg0: i32) -> (i32, i32) {
    %c0_i32 = arith.constant 0 : i32
    %c0_i32_0 = arith.constant 0 : i32
    %c0_i32_1 = arith.constant 0 : i32
    return %c0_i32, %c0_i32_0 : i32, i32
  }
  func.func @transform_6(%arg0: i32) -> (i32, i32) {
    %c0_i32 = arith.constant 0 : i32
    %c0_i32_0 = arith.constant 0 : i32
    %c0_i32_1 = arith.constant 0 : i32
    return %c0_i32, %c0_i32_0 : i32, i32
  }
  func.func @transform_7(%arg0: i32) -> (i32, i32) {
    %c0_i32 = arith.constant 0 : i32
    %c0_i32_0 = arith.constant 0 : i32
    return %arg0, %c0_i32 : i32, i32
  }
}

</mosaic_0001>

<llo_original>
// kernel: tpu_custom_call.1
$region0: #{tpu_custom_call.1}
  #allocation0 [shape = 'u32[]', space=smem, size = 0x4, offset = 0x4, fixed_abs, tag = 'smem constant byte address 0x4 - core index']
  #allocation1 [shape = 'u32[144,128]{1,0:T(1,128)}', space=vmem, size = 0x12000, scoped, tag = 'internal scratch']
  %s0 = inlined_call_operand.hbm [shape: f32[16,128], index: 0, kind: input, shape index: {}]
  %s1 = inlined_call_operand.vmem [shape: f32[1,128], index: 1, kind: input, shape index: {}]
  %s2 = inlined_call_operand.vmem [shape: f32[1,128], index: 2, kind: input, shape index: {}]
  %s3 = inlined_call_operand.hbm [shape: bf16[128,256], index: 3, kind: input, shape index: {}]
  %s4 = inlined_call_operand.vmem [shape: f32[1,256], index: 4, kind: input, shape index: {}]
  %s5 = inlined_call_operand.hbm [shape: bf16[256,128], index: 5, kind: input, shape index: {}]
  %s6 = inlined_call_operand.vmem [shape: f32[1,128], index: 6, kind: input, shape index: {}]
  %s7 = inlined_call_operand.hbm [shape: f32[16,128], index: 7, kind: output, shape index: {}]
  %s8 = sld [smem:[#allocation0]]
  $region73: #{tpu_custom_call.1} parent=0
    _
  %s10 = ssub.s32 1, %s8
  %s11 = scalar_select 0, %s10, %s8
  $region1: #{tpu_custom_call.1} parent=0
    #allocation2 [shape = 'u8[8192]{0}', space=vmem, size = 0x2000, scoped, tag = 'input window, operand 0']
    #allocation3 [shape = 's32[2]{0}', space=sflag, size = 0x8, scoped, tag = 'scoped memory for tpu_custom_call.1']
    #allocation4 [shape = 's32[2]{0}', space=sflag, size = 0x8, scoped, tag = 'scoped memory for tpu_custom_call.1']
    #allocation5 [shape = 'u8[65536]{0}', space=vmem, size = 0x10000, scoped, tag = 'input window, operand 3, single buffered']
    #allocation6 [shape = 's32[1]{0}', space=sflag, size = 0x4, scoped, tag = 'scoped memory for tpu_custom_call.1']
    #allocation7 [shape = 'u8[65536]{0}', space=vmem, size = 0x10000, scoped, tag = 'input window, operand 5, single buffered']
    #allocation8 [shape = 'u8[8192]{0}', space=vmem, size = 0x2000, scoped, tag = 'output window, operand 0']
    %12 = vsyncpa [#allocation3], 0
    %s13 = scalar_lea.sflag [#allocation3], 1
    %14 = vsyncpa %s13, 0
    %15 = vsyncpa [#allocation6], 0
    %16 = vsyncpa [#allocation4], 0
    %s17 = scalar_lea.sflag [#allocation4], 1
    %18 = vsyncpa %s17, 0
    loop: start=0, step=1, limit=4
    $region2: #{tpu_custom_call.1} parent=1 // loop_pre_header
      _
    $region3: #{tpu_custom_call.1} parent=1 // loop_header
      %s20 = sphi 0, %s24
      %p21 = scmp.ge.s32.totalorder %s20, 4
      %s30 = sphi 0, %s32
      %s33 = sphi 0, %s30
      %s34 = sphi 0, %s33
      %s50 = sphi 0, %s34
      %s54 = sphi 0, %s54
      %s56 = sphi 0, %s54
      %s57 = sphi 0, %s56
      %s71 = sphi 0, %s57
      %s75 = sphi 0, %s75
      %s77 = sphi 0, %s75
      %s78 = sphi 0, %s77
      %s92 = sphi 0, %s78
      %s96 = sphi 0, %s96
      %s98 = sphi 0, %s96
      %s99 = sphi 0, %s98
      %s113 = sphi 0, %s99
      %s117 = sphi 0, %s117
      %s119 = sphi 0, %s117
      %s120 = sphi 0, %s119
      %s134 = sphi 0, %s120
      %s138 = sphi 0, %s138
      %s140 = sphi 0, %s138
      %s141 = sphi 0, %s140
      %s155 = sphi 0, %s141
      %s159 = sphi 0, %s159
      %s161 = sphi 0, %s159
      %s162 = sphi 0, %s161
      %s176 = sphi 0, %s162
      %s182 = sphi 0, %s184
      %s185 = sphi 0, %s182
      %s186 = sphi 0, %s185
      %s202 = sphi 0, %s186
    $region4: #{tpu_custom_call.1} parent=1 // loop_header_branch
      %23 = sbr.rel (%p21) target = $region8
    $region5: #{tpu_custom_call.1} parent=1 // loop_body
      %s25 = ssub.s32 %s20, 1
      %s26 = ssub.s32 %s20, 2
      %s27 = sadd.s32 %s20, 1
      %s28 = ssub.s32 %s20, %s27
      %p29 = scmp.eq.s32.totalorder %s28, 0
      %s31 = sadd.s32 %s30, 1
      %s32 = scalar_select %p29, %s30, %s31
      %p35 = pneg %p29
      %p36 = scmp.eq.s32.totalorder %s20, 1
      %p37 = por %p35, %p36
      %p38 = scmp.ne.s32.totalorder %s30, %s33
      %p39 = scmp.eq.s32.totalorder %s20, 0
      %p40 = por %p38, %p39
      %p41 = scmp.ne.s32.totalorder %s30, %s33
      %p42 = scmp.eq.s32.totalorder %s25, 1
      %p43 = por %p41, %p42
      %p44 = scmp.ne.s32.totalorder %s33, %s34
      %p45 = scmp.eq.s32.totalorder %s25, 0
      %p46 = por %p44, %p45
      %p47 = scmp.ne.s32.totalorder %s33, %s34
      %p48 = scmp.eq.s32.totalorder %s26, 1
      %p49 = por %p47, %p48
      %p51 = scmp.ne.s32.totalorder %s34, %s50
      %p52 = scmp.eq.s32.totalorder %s26, 0
      %p53 = por %p51, %p52
      %s55 = sadd.s32 %s54, 1
      %p58 = scmp.eq.s32.totalorder %s20, 1
      %p59 = scmp.ne.s32.totalorder %s54, %s56
      %p60 = scmp.eq.s32.totalorder %s20, 0
      %p61 = por %p59, %p60
      %p62 = scmp.ne.s32.totalorder %s54, %s56
      %p63 = scmp.eq.s32.totalorder %s25, 1
      %p64 = por %p62, %p63
      %p65 = scmp.ne.s32.totalorder %s56, %s57
      %p66 = scmp.eq.s32.totalorder %s25, 0
      %p67 = por %p65, %p66
      %p68 = scmp.ne.s32.totalorder %s56, %s57
      %p69 = scmp.eq.s32.totalorder %s26, 1
      %p70 = por %p68, %p69
      %p72 = scmp.ne.s32.totalorder %s57, %s71
      %p73 = scmp.eq.s32.totalorder %s26, 0
      %p74 = por %p72, %p73
      %s76 = sadd.s32 %s75, 1
      %p79 = scmp.eq.s32.totalorder %s20, 1
      %p80 = scmp.ne.s32.totalorder %s75, %s77
      %p81 = scmp.eq.s32.totalorder %s20, 0
      %p82 = por %p80, %p81
      %p83 = scmp.ne.s32.totalorder %s75, %s77
      %p84 = scmp.eq.s32.totalorder %s25, 1
      %p85 = por %p83, %p84
      %p86 = scmp.ne.s32.totalorder %s77, %s78
      %p87 = scmp.eq.s32.totalorder %s25, 0
      %p88 = por %p86, %p87
      %p89 = scmp.ne.s32.totalorder %s77, %s78
      %p90 = scmp.eq.s32.totalorder %s26, 1
      %p91 = por %p89, %p90
      %p93 = scmp.ne.s32.totalorder %s78, %s92
      %p94 = scmp.eq.s32.totalorder %s26, 0
      %p95 = por %p93, %p94
      %s97 = sadd.s32 %s96, 1
      %p100 = scmp.eq.s32.totalorder %s20, 1
      %p101 = scmp.ne.s32.totalorder %s96, %s98
      %p102 = scmp.eq.s32.totalorder %s20, 0
      %p103 = por %p101, %p102
      %p104 = scmp.ne.s32.totalorder %s96, %s98
      %p105 = scmp.eq.s32.totalorder %s25, 1
      %p106 = por %p104, %p105
      %p107 = scmp.ne.s32.totalorder %s98, %s99
      %p108 = scmp.eq.s32.totalorder %s25, 0
      %p109 = por %p107, %p108
      %p110 = scmp.ne.s32.totalorder %s98, %s99
      %p111 = scmp.eq.s32.totalorder %s26, 1
      %p112 = por %p110, %p111
      %p114 = scmp.ne.s32.totalorder %s99, %s113
      %p115 = scmp.eq.s32.totalorder %s26, 0
      %p116 = por %p114, %p115
      %s118 = sadd.s32 %s117, 1
      %p121 = scmp.eq.s32.totalorder %s20, 1
      %p122 = scmp.ne.s32.totalorder %s117, %s119
      %p123 = scmp.eq.s32.totalorder %s20, 0
      %p124 = por %p122, %p123
      %p125 = scmp.ne.s32.totalorder %s117, %s119
      %p126 = scmp.eq.s32.totalorder %s25, 1
      %p127 = por %p125, %p126
      %p128 = scmp.ne.s32.totalorder %s119, %s120
      %p129 = scmp.eq.s32.totalorder %s25, 0
      %p130 = por %p128, %p129
      %p131 = scmp.ne.s32.totalorder %s119, %s120
      %p132 = scmp.eq.s32.totalorder %s26, 1
      %p133 = por %p131, %p132
      %p135 = scmp.ne.s32.totalorder %s120, %s134
      %p136 = scmp.eq.s32.totalorder %s26, 0
      %p137 = por %p135, %p136
      %s139 = sadd.s32 %s138, 1
      %p142 = scmp.eq.s32.totalorder %s20, 1
      %p143 = scmp.ne.s32.totalorder %s138, %s140
      %p144 = scmp.eq.s32.totalorder %s20, 0
      %p145 = por %p143, %p144
      %p146 = scmp.ne.s32.totalorder %s138, %s140
      %p147 = scmp.eq.s32.totalorder %s25, 1
      %p148 = por %p146, %p147
      %p149 = scmp.ne.s32.totalorder %s140, %s141
      %p150 = scmp.eq.s32.totalorder %s25, 0
      %p151 = por %p149, %p150
      %p152 = scmp.ne.s32.totalorder %s140, %s141
      %p153 = scmp.eq.s32.totalorder %s26, 1
      %p154 = por %p152, %p153
      %p156 = scmp.ne.s32.totalorder %s141, %s155
      %p157 = scmp.eq.s32.totalorder %s26, 0
      %p158 = por %p156, %p157
      %s160 = sadd.s32 %s159, 1
      %p163 = scmp.eq.s32.totalorder %s20, 1
      %p164 = scmp.ne.s32.totalorder %s159, %s161
      %p165 = scmp.eq.s32.totalorder %s20, 0
      %p166 = por %p164, %p165
      %p167 = scmp.ne.s32.totalorder %s159, %s161
      %p168 = scmp.eq.s32.totalorder %s25, 1
      %p169 = por %p167, %p168
      %p170 = scmp.ne.s32.totalorder %s161, %s162
      %p171 = scmp.eq.s32.totalorder %s25, 0
      %p172 = por %p170, %p171
      %p173 = scmp.ne.s32.totalorder %s161, %s162
      %p174 = scmp.eq.s32.totalorder %s26, 1
      %p175 = por %p173, %p174
      %p177 = scmp.ne.s32.totalorder %s162, %s176
      %p178 = scmp.eq.s32.totalorder %s26, 0
      %p179 = por %p177, %p178
      %s180 = ssub.s32 %s20, %s27
      %p181 = scmp.eq.s32.totalorder %s180, 0
      %s183 = sadd.s32 %s182, 1
      %s184 = scalar_select %p181, %s182, %s183
      %p187 = pneg %p181
      %p188 = scmp.eq.s32.totalorder %s20, 1
      %p189 = por %p187, %p188
      %p190 = scmp.ne.s32.totalorder %s182, %s185
      %p191 = scmp.eq.s32.totalorder %s20, 0
      %p192 = por %p190, %p191
      %p193 = scmp.ne.s32.totalorder %s182, %s185
      %p194 = scmp.eq.s32.totalorder %s25, 1
      %p195 = por %p193, %p194
      %p196 = scmp.ne.s32.totalorder %s185, %s186
      %p197 = scmp.eq.s32.totalorder %s25, 0
      %p198 = por %p196, %p197
      %p199 = scmp.ne.s32.totalorder %s185, %s186
      %p200 = scmp.eq.s32.totalorder %s26, 1
      %p201 = por %p199, %p200
      %p203 = scmp.ne.s32.totalorder %s186, %s202
      %p204 = scmp.eq.s32.totalorder %s26, 0
      %p205 = por %p203, %p204
      %p206 = scmp.le.s32.totalorder 1, %s20
      %p207 = scmp.lt.s32.totalorder %s20, 3
      %p208 = pnand %p206, %p207
      %p209 = pneg %p208
      // Predicated region
      $region9: #{tpu_custom_call.1} parent=5 // pred_check
        _
      $region10: #{tpu_custom_call.1} parent=5 // pred_check_branch
        %211 = sbr.rel (%p208) target = $region12
      $region11: #{tpu_custom_call.1} parent=5 // pred_region
        %s212 = ssub.s32 %s20, 1
        // Predicated region
        $region13: #{tpu_custom_call.1} parent=11 // pred_check
          %p213 = pneg %p67
        $region14: #{tpu_custom_call.1} parent=11 // pred_check_branch
          %215 = sbr.rel (%p213) target = $region16
        $region15: #{tpu_custom_call.1} parent=11 // pred_region
          _
        $region16: #{tpu_custom_call.1} parent=11 // pred_fallthru
          _
        // Predicated region
        $region17: #{tpu_custom_call.1} parent=11 // pred_check
          %p216 = pneg %p88
        $region18: #{tpu_custom_call.1} parent=11 // pred_check_branch
          %218 = sbr.rel (%p216) target = $region20
        $region19: #{tpu_custom_call.1} parent=11 // pred_region
          _
        $region20: #{tpu_custom_call.1} parent=11 // pred_fallthru
          _
        // Predicated region
        $region21: #{tpu_custom_call.1} parent=11 // pred_check
          %p219 = pneg %p109
        $region22: #{tpu_custom_call.1} parent=11 // pred_check_branch
          %221 = sbr.rel (%p219) target = $region24
        $region23: #{tpu_custom_call.1} parent=11 // pred_region
          %s223 = ssub.s32 2048, 2048
          %224 = vsyncadd [#allocation6], %s223
          %s225 = sshll.u32 [#allocation5], 4
          %s226 = int_to_ptr.vmem [resolvable:$true] %s225
          %231 = dma.hbm_to_vmem [thread:$0]  %s3, 2048, %s226, [#allocation6], 128, 128, 8
        $region24: #{tpu_custom_call.1} parent=11 // pred_fallthru
          _
        // Predicated region
        $region25: #{tpu_custom_call.1} parent=11 // pred_check
          %p232 = pneg %p130
        $region26: #{tpu_custom_call.1} parent=11 // pred_check_branch
          %234 = sbr.rel (%p232) target = $region28
        $region27: #{tpu_custom_call.1} parent=11 // pred_region
          _
        $region28: #{tpu_custom_call.1} parent=11 // pred_fallthru
          _
        // Predicated region
        $region29: #{tpu_custom_call.1} parent=11 // pred_check
          %p235 = pneg %p151
        $region30: #{tpu_custom_call.1} parent=11 // pred_check_branch
          %237 = sbr.rel (%p235) target = $region32
        $region31: #{tpu_custom_call.1} parent=11 // pred_region
          %s239 = ssub.s32 2048, 2048
          %240 = vsyncadd [#allocation6], %s239
          %s241 = sshll.u32 [#allocation7], 4
          %s242 = int_to_ptr.vmem [resolvable:$true] %s241
          %247 = dma.hbm_to_vmem [thread:$0]  %s5, 2048, %s242, [#allocation6], 64, 64, 4
        $region32: #{tpu_custom_call.1} parent=11 // pred_fallthru
          _
        // Predicated region
        $region33: #{tpu_custom_call.1} parent=11 // pred_check
          %p248 = pneg %p172
        $region34: #{tpu_custom_call.1} parent=11 // pred_check_branch
          %250 = sbr.rel (%p248) target = $region36
        $region35: #{tpu_custom_call.1} parent=11 // pred_region
          _
        $region36: #{tpu_custom_call.1} parent=11 // pred_fallthru
          _
      $region12: #{tpu_custom_call.1} parent=5 // pred_fallthru
        _
      %p251 = scmp.lt.s32.totalorder %s20, 2
      // Predicated region
      $region37: #{tpu_custom_call.1} parent=5 // pred_check
        %p252 = pneg %p251
      $region38: #{tpu_custom_call.1} parent=5 // pred_check_branch
        %254 = sbr.rel (%p252) target = $region40
      $region39: #{tpu_custom_call.1} parent=5 // pred_region
        // Predicated region
        $region41: #{tpu_custom_call.1} parent=39 // pred_check
          %p255 = pneg %p40
        $region42: #{tpu_custom_call.1} parent=39 // pred_check_branch
          %257 = sbr.rel (%p255) target = $region44
        $region43: #{tpu_custom_call.1} parent=39 // pred_region
          %s258 = sand.u32 %s30, 1
          %s259 = scalar_lea.sflag [#allocation3], %s258
          %s260 = sand.u32 %s30, 1
          %s261 = smul.addr %s260, 8
          %s262 = scalar_lea.vmem [#allocation2], %s261
          %s264 = ssub.s32 128, 128
          %265 = vsyncadd %s259, %s264
          %s266 = smul.addr %s20, 128
          %s267 = scalar_lea.hbm %s0, %s266
          %s269 = sshll.u32 %s262, 4
          %s270 = int_to_ptr.vmem [resolvable:$true] %s269
          %272 = dma.hbm_to_vmem [thread:$0]  %s267, 128, %s270, %s259
        $region44: #{tpu_custom_call.1} parent=39 // pred_fallthru
          _
      $region40: #{tpu_custom_call.1} parent=5 // pred_fallthru
        _
      %p273 = scmp.le.s32.totalorder 1, %s20
      %p274 = scmp.lt.s32.totalorder %s20, 3
      %p275 = pnand %p273, %p274
      %p276 = pneg %p275
      // Predicated region
      $region45: #{tpu_custom_call.1} parent=5 // pred_check
        _
      $region46: #{tpu_custom_call.1} parent=5 // pred_check_branch
        %278 = sbr.rel (%p275) target = $region48
      $region47: #{tpu_custom_call.1} parent=5 // pred_region
        %s279 = ssub.s32 %s20, 1
        %s280 = sand.u32 %s33, 1
        %s281 = scalar_lea.sflag [#allocation3], %s280
        %s282 = sand.u32 %s33, 1
        %s283 = smul.addr %s282, 8
        %s284 = scalar_lea.vmem [#allocation2], %s283
        // Predicated region
        $region49: #{tpu_custom_call.1} parent=47 // pred_check
          %p285 = pneg %p46
        $region50: #{tpu_custom_call.1} parent=47 // pred_check_branch
          %287 = sbr.rel (%p285) target = $region52
        $region51: #{tpu_custom_call.1} parent=47 // pred_region
          %288 = dma.done %s281, 128
        $region52: #{tpu_custom_call.1} parent=47 // pred_fallthru
          _
        // Predicated region
        $region53: #{tpu_custom_call.1} parent=47 // pred_check
          %p289 = pneg %p109
        $region54: #{tpu_custom_call.1} parent=47 // pred_check_branch
          %291 = sbr.rel (%p289) target = $region56
        $region55: #{tpu_custom_call.1} parent=47 // pred_region
          %292 = dma.done [#allocation6], 2048
        $region56: #{tpu_custom_call.1} parent=47 // pred_fallthru
          _
        // Predicated region
        $region57: #{tpu_custom_call.1} parent=47 // pred_check
          %p293 = pneg %p151
        $region58: #{tpu_custom_call.1} parent=47 // pred_check_branch
          %295 = sbr.rel (%p293) target = $region60
        $region59: #{tpu_custom_call.1} parent=47 // pred_region
          %296 = dma.done [#allocation6], 2048
        $region60: #{tpu_custom_call.1} parent=47 // pred_fallthru
          _
        %s297 = sand.u32 %s33, 1
        %s298 = scalar_lea.sflag [#allocation3], %s297
        %s299 = sand.u32 %s33, 1
        %s300 = smul.addr %s299, 8
        %s301 = scalar_lea.vmem [#allocation2], %s300
        %p302 = pneg %p46
        %p303 = pneg %p43
        %p304 = pneg %p67
        %p305 = pneg %p64
        %p306 = pneg %p88
        %p307 = pneg %p85
        %p308 = pneg %p109
        %p309 = pneg %p106
        %p310 = pneg %p130
        %p311 = pneg %p127
        %p312 = pneg %p151
        %p313 = pneg %p148
        %p314 = pneg %p172
        %p315 = pneg %p169
        %p316 = pneg %p198
        %p317 = pneg %p195
        %s318 = sand.u32 %s185, 1
        %s319 = scalar_lea.sflag [#allocation4], %s318
        %s320 = sand.u32 %s185, 1
        %s321 = smul.addr %s320, 8
        %s322 = scalar_lea.vmem [#allocation8], %s321
        %v324 = vld [vmem:[%s284] sm:$0xff]
        %v325 = vld [vmem:[%s1] sm:$0x1]
        %v326 = vld [vmem:[%s2] sm:$0x1]
        %327 = vadd.xlane.f32.xlu0 %v324
        %v328 = vpop.xlane.xlu0 %327
        %v329 = vrcp.pop 128.0
        %v330 = vmul.f32 %v328, %v329
        %v331 = vmul.f32 %v324, %v324
        %332 = vadd.xlane.f32.xlu0 %v331
        %v333 = vpop.xlane.xlu0 %332
        %v334 = vmul.f32 %v333, %v329
        %v335 = vmul.f32 %v330, %v330
        %v336 = vsub.f32 %v334, %v335
        %v337 = vmax.f32 %v336, 0.0
        %v338 = vadd.f32 %v337, 1e-06
        %v339 = vrsqrt.pop %v338
        %v340 = vsub.f32 %v324, %v330
        %v342 = vlaneseq
        %v343 = vshrl.u32 %v342, 7
        %v344 = vsub.s32 0, %v343
        %v345 = vrot.slane %v325, %v344
        %v347 = vmul.f32 %v339, %v345
        %v348 = vmul.f32 %v340, %v347
        %v350 = vlaneseq
        %v351 = vshrl.u32 %v350, 7
        %v352 = vsub.s32 0, %v351
        %v353 = vrot.slane %v326, %v352
        %v355 = vadd.f32 %v348, %v353
        %v356 = vpack.c.bf16 %v355, %v355
        %v357 = vld [vmem:[#allocation5] sm:$0xff]
        %v358 = vld [vmem:[#allocation5 + $0x8] sm:$0xff]
        %v359 = vld [vmem:[#allocation5 + $0x10] sm:$0xff]
        %v360 = vld [vmem:[#allocation5 + $0x18] sm:$0xff]
        %v361 = vld [vmem:[#allocation5 + $0x20] sm:$0xff]
        %v362 = vld [vmem:[#allocation5 + $0x28] sm:$0xff]
        %v363 = vld [vmem:[#allocation5 + $0x30] sm:$0xff]
        %v364 = vld [vmem:[#allocation5 + $0x38] sm:$0xff]
        %v365 = vld [vmem:[#allocation5 + $0x40] sm:$0xff]
        %v366 = vld [vmem:[#allocation5 + $0x48] sm:$0xff]
        %v367 = vld [vmem:[#allocation5 + $0x50] sm:$0xff]
        %v368 = vld [vmem:[#allocation5 + $0x58] sm:$0xff]
        %v369 = vld [vmem:[#allocation5 + $0x60] sm:$0xff]
        %v370 = vld [vmem:[#allocation5 + $0x68] sm:$0xff]
        %v371 = vld [vmem:[#allocation5 + $0x70] sm:$0xff]
        %v372 = vld [vmem:[#allocation5 + $0x78] sm:$0xff]
        %v373 = vld [vmem:[%s4] sm:$0x3]
        %v375 = vlaneseq
        %v376 = vshrl.u32 %v375, 7
        %v377 = vsub.s32 0, %v376
        %v378 = vrot.slane %v373, %v377
        %v379 = vlaneseq
        %v380 = vshrl.u32 %v379, 7
        %v381 = vsub.s32 1, %v380
        %v382 = vrot.slane %v373, %v381
        %v401 = vunpack.c.l.b16 %v357
        %v402 = vunpack.c.h.b16 %v357
        %v403 = vunpack.c.l.b16 %v358
        %v404 = vunpack.c.h.b16 %v358
        %v405 = vunpack.c.l.b16 %v359
        %v406 = vunpack.c.h.b16 %v359
        %v407 = vunpack.c.l.b16 %v360
        %v408 = vunpack.c.h.b16 %v360
        %v409 = vunpack.c.l.b16 %v361
        %v410 = vunpack.c.h.b16 %v361
        %v411 = vunpack.c.l.b16 %v362
        %v412 = vunpack.c.h.b16 %v362
        %v413 = vunpack.c.l.b16 %v363
        %v414 = vunpack.c.h.b16 %v363
        %v415 = vunpack.c.l.b16 %v364
        %v416 = vunpack.c.h.b16 %v364
        %v417 = vunpack.c.l.b16 %v365
        %v418 = vunpack.c.h.b16 %v365
        %v419 = vunpack.c.l.b16 %v366
        %v420 = vunpack.c.h.b16 %v366
        %v421 = vunpack.c.l.b16 %v367
        %v422 = vunpack.c.h.b16 %v367
        %v423 = vunpack.c.l.b16 %v368
        %v424 = vunpack.c.h.b16 %v368
        %v425 = vunpack.c.l.b16 %v369
        %v426 = vunpack.c.h.b16 %v369
        %v427 = vunpack.c.l.b16 %v370
        %v428 = vunpack.c.h.b16 %v370
        %v429 = vunpack.c.l.b16 %v371
        %v430 = vunpack.c.h.b16 %v371
        %v431 = vunpack.c.l.b16 %v372
        %v432 = vunpack.c.h.b16 %v372
        %v433 = vpack.c.b16 %v403, %v401
        %v434 = vpack.c.b16 %v404, %v402
        %v435 = vpack.c.b16 %v407, %v405
        %v436 = vpack.c.b16 %v408, %v406
        %v437 = vpack.c.b16 %v411, %v409
        %v438 = vpack.c.b16 %v412, %v410
        %v439 = vpack.c.b16 %v415, %v413
        %v440 = vpack.c.b16 %v416, %v414
        %v441 = vpack.c.b16 %v419, %v417
        %v442 = vpack.c.b16 %v420, %v418
        %v443 = vpack.c.b16 %v423, %v421
        %v444 = vpack.c.b16 %v424, %v422
        %v445 = vpack.c.b16 %v427, %v425
        %v446 = vpack.c.b16 %v428, %v426
        %v447 = vpack.c.b16 %v431, %v429
        %v448 = vpack.c.b16 %v432, %v430
        %465 = vmatprep.subr.bf16.mxu0 %v434
        %466 = vmatpush1.bf16.msra.mxu0 %v433
        %467 = vmatprep.subr.bf16.mxu0 %v436
        %468 = vmatpush1.bf16.msra.mxu0 %v435
        %469 = vmatprep.subr.bf16.mxu0 %v438
        %470 = vmatpush1.bf16.msra.mxu0 %v437
        %471 = vmatprep.subr.bf16.mxu0 %v440
        %472 = vmatpush1.bf16.msra.mxu0 %v439
        %473 = vmatprep.subr.bf16.mxu0 %v442
        %474 = vmatpush1.bf16.msra.mxu0 %v441
        %475 = vmatprep.subr.bf16.mxu0 %v444
        %476 = vmatpush1.bf16.msra.mxu0 %v443
        %477 = vmatprep.subr.bf16.mxu0 %v446
        %478 = vmatpush1.bf16.msra.mxu0 %v445
        %479 = vmatprep.subr.bf16.mxu0 %v448
        %480 = vmatpush1.bf16.msra.mxu0 %v447
        %481 = vmatprep.subr.bf16.mxu0 0
        %482 = vmatpush1.bf16.msra.mxu0 0
        %483 = vmatprep.subr.bf16.mxu0 0
        %484 = vmatpush1.bf16.msra.mxu0 0
        %485 = vmatprep.subr.bf16.mxu0 0
        %486 = vmatpush1.bf16.msra.mxu0 0
        %487 = vmatprep.subr.bf16.mxu0 0
        %488 = vmatpush1.bf16.msra.mxu0 0
        %489 = vmatprep.subr.bf16.mxu0 0
        %490 = vmatpush1.bf16.msra.mxu0 0
        %491 = vmatprep.subr.bf16.mxu0 0
        %492 = vmatpush1.bf16.msra.mxu0 0
        %493 = vmatprep.subr.bf16.mxu0 0
        %494 = vmatpush1.bf16.msra.mxu0 0
        %495 = vmatprep.subr.bf16.mxu0 0
        %496 = vmatpush1.bf16.msra.mxu0 0
        %497 = vmatprep.mubr.bf16.mxu0 0
        %498 = vmatmul.mubr.bf16.gmra.mrb[0].mxu0 %v356
        %v499 = vpop.f32.mrb[0].mxu0
        %v500 = vadd.f32 %v378, %v499
        %v501 = vpop.f32.mrb[0].mxu0
        %v502 = vadd.f32 %v382, %v501
        %v503 = vpop.f32.mrb[0].mxu0
        %v504 = vpop.f32.mrb[0].mxu0
        %505 = vdwg.mxu0
        %v506 = vmul.f32 %v500, 0.5
        %v507 = vmul.f32 %v502, 0.5
        %v508 = vmul.f32 %v500, 0.70710677
        %v509 = vmul.f32 %v502, 0.70710677
        %v510 = verf.f32.pop %v508
        %v511 = verf.f32.pop %v509
        %v512 = vadd.f32 %v510, 1.0
        %v513 = vadd.f32 %v511, 1.0
        %v514 = vmul.f32 %v506, %v512
        %v515 = vmul.f32 %v507, %v513
        %v516 = vpack.c.bf16 %v514, %v514
        %v517 = vpack.c.bf16 %v515, %v515
        %v518 = vld [vmem:[#allocation7] sm:$0xf]
        %v519 = vld [vmem:[#allocation7 + $0x4] sm:$0xf]
        %v520 = vld [vmem:[#allocation7 + $0x8] sm:$0xf]
        %v521 = vld [vmem:[#allocation7 + $0xc] sm:$0xf]
        %v522 = vld [vmem:[#allocation7 + $0x10] sm:$0xf]
        %v523 = vld [vmem:[#allocation7 + $0x14] sm:$0xf]
        %v524 = vld [vmem:[#allocation7 + $0x18] sm:$0xf]
        %v525 = vld [vmem:[#allocation7 + $0x1c] sm:$0xf]
        %v526 = vld [vmem:[#allocation7 + $0x20] sm:$0xf]
        %v527 = vld [vmem:[#allocation7 + $0x24] sm:$0xf]
        %v528 = vld [vmem:[#allocation7 + $0x28] sm:$0xf]
        %v529 = vld [vmem:[#allocation7 + $0x2c] sm:$0xf]
        %v530 = vld [vmem:[#allocation7 + $0x30] sm:$0xf]
        %v531 = vld [vmem:[#allocation7 + $0x34] sm:$0xf]
        %v532 = vld [vmem:[#allocation7 + $0x38] sm:$0xf]
        %v533 = vld [vmem:[#allocation7 + $0x3c] sm:$0xf]
        %v534 = vld [vmem:[#allocation7 + $0x40] sm:$0xf]
        %v535 = vld [vmem:[#allocation7 + $0x44] sm:$0xf]
        %v536 = vld [vmem:[#allocation7 + $0x48] sm:$0xf]
        %v537 = vld [vmem:[#allocation7 + $0x4c] sm:$0xf]
        %v538 = vld [vmem:[#allocation7 + $0x50] sm:$0xf]
        %v539 = vld [vmem:[#allocation7 + $0x54] sm:$0xf]
        %v540 = vld [vmem:[#allocation7 + $0x58] sm:$0xf]
        %v541 = vld [vmem:[#allocation7 + $0x5c] sm:$0xf]
        %v542 = vld [vmem:[#allocation7 + $0x60] sm:$0xf]
        %v543 = vld [vmem:[#allocation7 + $0x64] sm:$0xf]
        %v544 = vld [vmem:[#allocation7 + $0x68] sm:$0xf]
        %v545 = vld [vmem:[#allocation7 + $0x6c] sm:$0xf]
        %v546 = vld [vmem:[#allocation7 + $0x70] sm:$0xf]
        %v547 = vld [vmem:[#allocation7 + $0x74] sm:$0xf]
        %v548 = vld [vmem:[#allocation7 + $0x78] sm:$0xf]
        %v549 = vld [vmem:[#allocation7 + $0x7c] sm:$0xf]
        %v550 = vld [vmem:[%s6] sm:$0x1]
        %v552 = vlaneseq
        %v553 = vshrl.u32 %v552, 7
        %v554 = vsub.s32 0, %v553
        %v555 = vrot.slane %v550, %v554
        %v589 = vunpack.c.l.b16 %v518
        %v590 = vunpack.c.l.b16 %v519
        %v591 = vunpack.c.l.b16 %v520
        %v592 = vunpack.c.l.b16 %v521
        %v593 = vunpack.c.l.b16 %v522
        %v594 = vunpack.c.l.b16 %v523
        %v595 = vunpack.c.l.b16 %v524
        %v596 = vunpack.c.l.b16 %v525
        %v597 = vunpack.c.l.b16 %v526
        %v598 = vunpack.c.l.b16 %v527
        %v599 = vunpack.c.l.b16 %v528
        %v600 = vunpack.c.l.b16 %v529
        %v601 = vunpack.c.l.b16 %v530
        %v602 = vunpack.c.l.b16 %v531
        %v603 = vunpack.c.l.b16 %v532
        %v604 = vunpack.c.l.b16 %v533
        %v605 = vunpack.c.l.b16 %v534
        %v606 = vunpack.c.l.b16 %v535
        %v607 = vunpack.c.l.b16 %v536
        %v608 = vunpack.c.l.b16 %v537
        %v609 = vunpack.c.l.b16 %v538
        %v610 = vunpack.c.l.b16 %v539
        %v611 = vunpack.c.l.b16 %v540
        %v612 = vunpack.c.l.b16 %v541
        %v613 = vunpack.c.l.b16 %v542
        %v614 = vunpack.c.l.b16 %v543
        %v615 = vunpack.c.l.b16 %v544
        %v616 = vunpack.c.l.b16 %v545
        %v617 = vunpack.c.l.b16 %v546
        %v618 = vunpack.c.l.b16 %v547
        %v619 = vunpack.c.l.b16 %v548
        %v620 = vunpack.c.l.b16 %v549
        %v621 = vpack.c.b16 %v590, %v589
        %v622 = vpack.c.b16 %v592, %v591
        %v623 = vpack.c.b16 %v594, %v593
        %v624 = vpack.c.b16 %v596, %v595
        %v625 = vpack.c.b16 %v598, %v597
        %v626 = vpack.c.b16 %v600, %v599
        %v627 = vpack.c.b16 %v602, %v601
        %v628 = vpack.c.b16 %v604, %v603
        %v629 = vpack.c.b16 %v606, %v605
        %v630 = vpack.c.b16 %v608, %v607
        %v631 = vpack.c.b16 %v610, %v609
        %v632 = vpack.c.b16 %v612, %v611
        %v633 = vpack.c.b16 %v614, %v613
        %v634 = vpack.c.b16 %v616, %v615
        %v635 = vpack.c.b16 %v618, %v617
        %v636 = vpack.c.b16 %v620, %v619
        %653 = vmatprep.subr.bf16.mxu0 0
        %654 = vmatpush1.bf16.msra.mxu0 %v621
        %655 = vmatprep.subr.bf16.mxu0 0
        %656 = vmatpush1.bf16.msra.mxu0 %v622
        %657 = vmatprep.subr.bf16.mxu0 0
        %658 = vmatpush1.bf16.msra.mxu0 %v623
        %659 = vmatprep.subr.bf16.mxu0 0
        %660 = vmatpush1.bf16.msra.mxu0 %v624
        %661 = vmatprep.subr.bf16.mxu0 0
        %662 = vmatpush1.bf16.msra.mxu0 %v625
        %663 = vmatprep.subr.bf16.mxu0 0
        %664 = vmatpush1.bf16.msra.mxu0 %v626
        %665 = vmatprep.subr.bf16.mxu0 0
        %666 = vmatpush1.bf16.msra.mxu0 %v627
        %667 = vmatprep.subr.bf16.mxu0 0
        %668 = vmatpush1.bf16.msra.mxu0 %v628
        %669 = vmatprep.subr.bf16.mxu0 0
        %670 = vmatpush1.bf16.msra.mxu0 %v629
        %671 = vmatprep.subr.bf16.mxu0 0
        %672 = vmatpush1.bf16.msra.mxu0 %v630
        %673 = vmatprep.subr.bf16.mxu0 0
        %674 = vmatpush1.bf16.msra.mxu0 %v631
        %675 = vmatprep.subr.bf16.mxu0 0
        %676 = vmatpush1.bf16.msra.mxu0 %v632
        %677 = vmatprep.subr.bf16.mxu0 0
        %678 = vmatpush1.bf16.msra.mxu0 %v633
        %679 = vmatprep.subr.bf16.mxu0 0
        %680 = vmatpush1.bf16.msra.mxu0 %v634
        %681 = vmatprep.subr.bf16.mxu0 0
        %682 = vmatpush1.bf16.msra.mxu0 %v635
        %683 = vmatprep.subr.bf16.mxu0 0
        %684 = vmatpush1.bf16.msra.mxu0 %v636
        %685 = vmatprep.mubr.bf16.mxu0 %v517
        %686 = vmatmul.mubr.bf16.gmra.mrb[0].mxu0 %v516
        %v687 = vpop.f32.mrb[0].mxu0
        %v688 = vadd.f32 %v555, %v687
        %v689 = vpop.f32.mrb[0].mxu0
        %v690 = vpop.f32.mrb[0].mxu0
        %v691 = vpop.f32.mrb[0].mxu0
        %692 = vdwg.mxu0
        %v693 = vadd.f32 %v688, %v324
        %694 = vst [vmem:[%s322] sm:$0xff] %v693
        %s695 = sand.u32 %s185, 1
        %s696 = scalar_lea.sflag [#allocation4], %s695
        %s697 = sand.u32 %s185, 1
        %s698 = smul.addr %s697, 8
        %s699 = scalar_lea.vmem [#allocation8], %s698
        // Predicated region
        $region61: #{tpu_custom_call.1} parent=47 // pred_check
          %p700 = pneg %p195
        $region62: #{tpu_custom_call.1} parent=47 // pred_check_branch
          %702 = sbr.rel (%p700) target = $region64
        $region63: #{tpu_custom_call.1} parent=47 // pred_region
          %s704 = ssub.s32 128, 128
          %705 = vsyncadd %s696, %s704
          %s706 = smul.addr %s25, 128
          %s707 = scalar_lea.hbm %s7, %s706
          %s709 = sshll.u32 %s699, 4
          %s710 = int_to_ptr.vmem [resolvable:$true] %s709
          %712 = dma.vmem_to_hbm [thread:$0]  %s710, 128, %s707, %s696
        $region64: #{tpu_custom_call.1} parent=47 // pred_fallthru
          _
      $region48: #{tpu_custom_call.1} parent=5 // pred_fallthru
        _
      %p713 = scmp.le.s32.totalorder 2, %s20
      // Predicated region
      $region65: #{tpu_custom_call.1} parent=5 // pred_check
        %p714 = pneg %p713
      $region66: #{tpu_custom_call.1} parent=5 // pred_check_branch
        %716 = sbr.rel (%p714) target = $region68
      $region67: #{tpu_custom_call.1} parent=5 // pred_region
        %s717 = ssub.s32 %s20, 2
        // Predicated region
        $region69: #{tpu_custom_call.1} parent=67 // pred_check
          %p718 = pneg %p201
        $region70: #{tpu_custom_call.1} parent=67 // pred_check_branch
          %720 = sbr.rel (%p718) target = $region72
        $region71: #{tpu_custom_call.1} parent=67 // pred_region
          %s721 = sand.u32 %s186, 1
          %s722 = scalar_lea.sflag [#allocation4], %s721
          %s723 = sand.u32 %s186, 1
          %s724 = smul.addr %s723, 8
          %s725 = scalar_lea.vmem [#allocation8], %s724
          %726 = dma.done %s722, 128
        $region72: #{tpu_custom_call.1} parent=67 // pred_fallthru
          _
      $region68: #{tpu_custom_call.1} parent=5 // pred_fallthru
        _
    $region6: #{tpu_custom_call.1} parent=1 // loop_footer
      %s24 = sadd.s32 1, %s20
    $region7: #{tpu_custom_call.1} parent=1 // loop_footer_branch
      %19 = sbr.rel target = $region3
    $region8: #{tpu_custom_call.1} parent=1 // loop_exit
      _
    %727 = vsyncpa [#allocation3], 1
    %s728 = scalar_lea.sflag [#allocation3], 1
    %729 = vsyncpa %s728, 1
    %730 = vsyncpa [#allocation6], 1
    %731 = vsyncpa [#allocation4], 1
    %s732 = scalar_lea.sflag [#allocation4], 1
    %733 = vsyncpa %s732, 1

</llo_original>
